<compile_context>
chip_gen: v7x
topology: tpu7x:2x2x1
jax: 0.10.0
libtpu: 0.0.40
codegen_flags: <defaults>
</compile_context>

<pallas_src>
import functools

import jax
import jax.numpy as jnp
from jax.experimental import pallas as pl
from jax.experimental.pallas import tpu as pltpu


def _round_up(x, m):
    return (x + m - 1) // m * m


def qnet_kernel(x_ref, w1_ref, b1_ref, w2_ref, b2_ref, o_ref):
    # Layer 1: (TB, 8) @ (8, 256) on the MXU, bf16 operands, f32 accumulation.
    # Bias-add + ReLU fused in f32 (no extra VMEM temp).
    h = jnp.maximum(
        jnp.dot(x_ref[...].astype(jnp.bfloat16),
                w1_ref[...].astype(jnp.bfloat16),
                preferred_element_type=jnp.float32)
        + b1_ref[...],
        0.0,
    )
    # Layer 2: (TB, 256) @ (256, 128) -> lane-dense (padded) output tile.
    out = jnp.dot(h.astype(jnp.bfloat16),
                  w2_ref[...].astype(jnp.bfloat16),
                  preferred_element_type=jnp.float32) + b2_ref[...]
    o_ref[...] = out.astype(o_ref.dtype)


@functools.partial(jax.jit, static_argnames=("block_b",))
def qnet_forward(x, w1, b1, w2, b2, *, block_b=1024):
    B, in_dim = x.shape
    hidden = w1.shape[1]
    out_dim = w2.shape[1]

    in_pad = _round_up(in_dim, 8)      # 4 -> 8  (sublane-aligned contraction)
    out_pad = _round_up(out_dim, 128)  # 2 -> 128 (lane-dense output stores)

    # Batch tile: multiple of 8; small batches collapse to a single block.
    tb = min(block_b, _round_up(B, 8))
    b_pad = _round_up(B, tb)

    # Zero-pad inputs / weights in the wrapper (padding contributes exactly 0).
    x_p = jnp.zeros((b_pad, in_pad), x.dtype).at[:B, :in_dim].set(x)
    w1_p = jnp.zeros((in_pad, hidden), w1.dtype).at[:in_dim, :].set(w1)
    w2_p = jnp.zeros((hidden, out_pad), w2.dtype).at[:, :out_dim].set(w2)
    b2_p = jnp.zeros((1, out_pad), b2.dtype).at[:, :out_dim].set(b2)

    grid = (b_pad // tb,)

    flops = 2 * b_pad * (in_pad * hidden + hidden * out_pad)
    bytes_accessed = 4 * (b_pad * in_pad + in_pad * hidden + hidden
                          + hidden * out_pad + out_pad + b_pad * out_pad)

    out = pl.pallas_call(
        qnet_kernel,
        out_shape=jax.ShapeDtypeStruct((b_pad, out_pad), x.dtype),
        grid=grid,
        in_specs=[
            pl.BlockSpec((tb, in_pad), lambda i: (i, 0)),      # x tile, pipelined
            pl.BlockSpec((in_pad, hidden), lambda i: (0, 0)),  # w1, VMEM-resident
            pl.BlockSpec((1, hidden), lambda i: (0, 0)),       # b1, VMEM-resident
            pl.BlockSpec((hidden, out_pad), lambda i: (0, 0)), # w2 (padded), resident
            pl.BlockSpec((1, out_pad), lambda i: (0, 0)),      # b2 (padded), resident
        ],
        out_specs=pl.BlockSpec((tb, out_pad), lambda i: (i, 0)),
        compiler_params=pltpu.CompilerParams(
            dimension_semantics=("parallel",)),
        cost_estimate=pl.CostEstimate(
            flops=flops, transcendentals=0, bytes_accessed=bytes_accessed),
    )(x_p, w1_p, b1, w2_p, b2_p)

    # Strip batch / output-lane padding.
    return out[:B, :out_dim]


def qnet_reference(x, w1, b1, w2, b2):
    """Plain-JAX reference with the same bf16-operand / f32-accumulate numerics."""
    h = jnp.maximum(
        jnp.dot(x.astype(jnp.bfloat16), w1.astype(jnp.bfloat16),
                preferred_element_type=jnp.float32) + b1, 0.0)
    return jnp.dot(h.astype(jnp.bfloat16), w2.astype(jnp.bfloat16),
                   preferred_element_type=jnp.float32) + b2


def init_params(key, input_dim=4, hidden_dim=256, output_dim=2):
    """Deterministic init mimicking PyTorch nn.Linear default U(-1/sqrt(fan_in), 1/sqrt(fan_in))."""
    k1, k2, k3, k4 = jax.random.split(key, 4)
    bound1 = 1.0 / jnp.sqrt(input_dim)
    bound2 = 1.0 / jnp.sqrt(hidden_dim)
    # Stored as (in, out) so the kernel does x @ W.
    w1 = jax.random.uniform(k1, (input_dim, hidden_dim), jnp.float32, -bound1, bound1)
    b1 = jax.random.uniform(k2, (1, hidden_dim), jnp.float32, -bound1, bound1)
    w2 = jax.random.uniform(k3, (hidden_dim, output_dim), jnp.float32, -bound2, bound2)
    b2 = jax.random.uniform(k4, (1, output_dim), jnp.float32, -bound2, bound2)
    return w1, b1, w2, b2


if __name__ == "__main__":
    key = jax.random.PRNGKey(0)
    kx, kp = jax.random.split(key)

    batch = 8
    input_dim, hidden_dim, output_dim = 4, 256, 2

    x = jax.random.normal(kx, (batch, input_dim), dtype=jnp.float32)
    w1, b1, w2, b2 = init_params(kp, input_dim, hidden_dim, output_dim)

    out = qnet_forward(x, w1, b1, w2, b2)
    out = jax.block_until_ready(out)
    assert out.shape == (batch, output_dim)

    # Tight check against a reference using identical bf16-operand / f32-accumulate math.
    ref_bf16 = qnet_reference(x, w1, b1, w2, b2)
    assert jnp.allclose(out, ref_bf16, atol=1e-5, rtol=1e-5)

    # Loose sanity check against the pure-f32 PyTorch-equivalent forward.
    ref_f32 = jnp.maximum(x @ w1 + b1, 0.0) @ w2 + b2
    assert jnp.allclose(out, ref_f32, atol=5e-2, rtol=5e-2)

    print("KERNEL_OK")
</pallas_src>

<mosaic_0001>
module attributes {stable_mosaic.version = 11 : i64} {
  func.func @qnet_kernel(%arg0: i32, %arg1: memref<8x8xf32, #tpu.memory_space<vmem>>, %arg2: memref<8x256xf32, #tpu.memory_space<vmem>>, %arg3: memref<1x256xf32, #tpu.memory_space<vmem>>, %arg4: memref<256x128xf32, #tpu.memory_space<vmem>>, %arg5: memref<1x128xf32, #tpu.memory_space<vmem>>, %arg6: memref<8x128xf32, #tpu.memory_space<vmem>>) attributes {dimension_semantics = [#tpu.dimension_semantics<parallel>], iteration_bounds = array<i64: 1>, scalar_prefetch = 0 : i64, scratch_operands = 0 : i64, tpu.core_type = #tpu.core_type<tc>, window_params = [{transform_indices = @transform_0, window_bounds = array<i64: 8, 8>}, {pipeline_mode = #tpu.pipeline_mode<synchronous>, transform_indices = @transform_1, window_bounds = array<i64: 8, 256>}, {pipeline_mode = #tpu.pipeline_mode<synchronous>, transform_indices = @transform_2, window_bounds = array<i64: 1, 256>}, {pipeline_mode = #tpu.pipeline_mode<synchronous>, transform_indices = @transform_3, window_bounds = array<i64: 256, 128>}, {pipeline_mode = #tpu.pipeline_mode<synchronous>, transform_indices = @transform_4, window_bounds = array<i64: 1, 128>}, {transform_indices = @transform_5, window_bounds = array<i64: 8, 128>}]} {
    %c0 = arith.constant 0 : index
    %c0_0 = arith.constant 0 : index
    %0 = vector.load %arg1[%c0, %c0_0] : memref<8x8xf32, #tpu.memory_space<vmem>>, vector<8x8xf32>
    %1 = arith.truncf %0 : vector<8x8xf32> to vector<8x8xbf16>
    %c0_1 = arith.constant 0 : index
    %c0_2 = arith.constant 0 : index
    %2 = vector.load %arg2[%c0_1, %c0_2] : memref<8x256xf32, #tpu.memory_space<vmem>>, vector<8x256xf32>
    %3 = arith.truncf %2 : vector<8x256xf32> to vector<8x256xbf16>
    %cst = arith.constant dense<0.000000e+00> : vector<8x256xf32>
    %4 = tpu.matmul %1, %3, %cst {dimension_numbers = #tpu.dot_dimension_numbers<[1], [0], [0], [1], [0, 0, 1, 1], [], []>} : vector<8x8xbf16>, vector<8x256xbf16>, vector<8x256xf32> -> vector<8x256xf32>
    %c0_3 = arith.constant 0 : index
    %c0_4 = arith.constant 0 : index
    %5 = vector.load %arg3[%c0_3, %c0_4] : memref<1x256xf32, #tpu.memory_space<vmem>>, vector<1x256xf32>
    %6 = vector.broadcast %5 : vector<1x256xf32> to vector<8x256xf32>
    %7 = arith.addf %4, %6 : vector<8x256xf32>
    %cst_5 = arith.constant 0.000000e+00 : f32
    %8 = vector.broadcast %cst_5 : f32 to vector<8x256xf32>
    %9 = arith.maximumf %7, %8 : vector<8x256xf32>
    %10 = arith.truncf %9 : vector<8x256xf32> to vector<8x256xbf16>
    %c0_6 = arith.constant 0 : index
    %c0_7 = arith.constant 0 : index
    %11 = vector.load %arg4[%c0_6, %c0_7] : memref<256x128xf32, #tpu.memory_space<vmem>>, vector<256x128xf32>
    %12 = arith.truncf %11 : vector<256x128xf32> to vector<256x128xbf16>
    %cst_8 = arith.constant dense<0.000000e+00> : vector<8x128xf32>
    %13 = tpu.matmul %10, %12, %cst_8 {dimension_numbers = #tpu.dot_dimension_numbers<[1], [0], [0], [1], [0, 0, 1, 1], [], []>} : vector<8x256xbf16>, vector<256x128xbf16>, vector<8x128xf32> -> vector<8x128xf32>
    %c0_9 = arith.constant 0 : index
    %c0_10 = arith.constant 0 : index
    %14 = vector.load %arg5[%c0_9, %c0_10] : memref<1x128xf32, #tpu.memory_space<vmem>>, vector<1x128xf32>
    %15 = vector.broadcast %14 : vector<1x128xf32> to vector<8x128xf32>
    %16 = arith.addf %13, %15 : vector<8x128xf32>
    %c0_11 = arith.constant 0 : index
    %c0_12 = arith.constant 0 : index
    %17 = vector.load %arg6[%c0_11, %c0_12] : memref<8x128xf32, #tpu.memory_space<vmem>>, vector<8x128xf32>
    tpu.vector_store %arg6[%c0_11, %c0_12], %16 {strides = array<i32>} : memref<8x128xf32, #tpu.memory_space<vmem>>, vector<8x128xf32>,
    return
  }
  func.func @transform_0(%arg0: i32) -> (i32, i32) {
    %c0_i32 = arith.constant 0 : i32
    %c0_i32_0 = arith.constant 0 : i32
    return %arg0, %c0_i32 : i32, i32
  }
  func.func @transform_1(%arg0: i32) -> (i32, i32) {
    %c0_i32 = arith.constant 0 : i32
    %c0_i32_0 = arith.constant 0 : i32
    %c0_i32_1 = arith.constant 0 : i32
    return %c0_i32, %c0_i32_0 : i32, i32
  }
  func.func @transform_2(%arg0: i32) -> (i32, i32) {
    %c0_i32 = arith.constant 0 : i32
    %c0_i32_0 = arith.constant 0 : i32
    %c0_i32_1 = arith.constant 0 : i32
    return %c0_i32, %c0_i32_0 : i32, i32
  }
  func.func @transform_3(%arg0: i32) -> (i32, i32) {
    %c0_i32 = arith.constant 0 : i32
    %c0_i32_0 = arith.constant 0 : i32
    %c0_i32_1 = arith.constant 0 : i32
    return %c0_i32, %c0_i32_0 : i32, i32
  }
  func.func @transform_4(%arg0: i32) -> (i32, i32) {
    %c0_i32 = arith.constant 0 : i32
    %c0_i32_0 = arith.constant 0 : i32
    %c0_i32_1 = arith.constant 0 : i32
    return %c0_i32, %c0_i32_0 : i32, i32
  }
  func.func @transform_5(%arg0: i32) -> (i32, i32) {
    %c0_i32 = arith.constant 0 : i32
    %c0_i32_0 = arith.constant 0 : i32
    return %arg0, %c0_i32 : i32, i32
  }
}

</mosaic_0001>

<llo_original>
// kernel: qnet_forward.1
$region0: #{qnet_forward.1}
  #allocation0 [shape = 'u32[]', space=smem, size = 0x4, offset = 0x4, fixed_abs, tag = 'smem constant byte address 0x4 - core index']
  #allocation1 [shape = 'u32[144,128]{1,0:T(1,128)}', space=vmem, size = 0x12000, scoped, tag = 'internal scratch']
  %s0 = inlined_call_operand.vmem [shape: f32[8,8], index: 0, kind: input, shape index: {}]
  %s1 = inlined_call_operand.vmem [shape: f32[8,256], index: 1, kind: input, shape index: {}]
  %s2 = inlined_call_operand.vmem [shape: f32[1,256], index: 2, kind: input, shape index: {}]
  %s3 = inlined_call_operand.vmem [shape: f32[256,128], index: 3, kind: input, shape index: {}]
  %s4 = inlined_call_operand.vmem [shape: f32[1,128], index: 4, kind: input, shape index: {}]
  %s5 = inlined_call_operand.vmem [shape: f32[8,128], index: 5, kind: output, shape index: {}]
  %s6 = sld [smem:[#allocation0]]
  $region30: #{qnet_forward.1} parent=0
    _
  %s8 = ssub.s32 1, %s6
  %s9 = scalar_select 0, %s8, %s6
  // Predicated region
  $region2: #{qnet_forward.1} parent=0 // pred_check
    _
  $region3: #{qnet_forward.1} parent=0 // pred_check_branch
    %11 = sbr.rel (0) target = $region5
  $region4: #{qnet_forward.1} parent=0 // pred_region
    _
  $region5: #{qnet_forward.1} parent=0 // pred_fallthru
    _
  // Predicated region
  $region6: #{qnet_forward.1} parent=0 // pred_check
    _
  $region7: #{qnet_forward.1} parent=0 // pred_check_branch
    %13 = sbr.rel (0) target = $region9
  $region8: #{qnet_forward.1} parent=0 // pred_region
    _
  $region9: #{qnet_forward.1} parent=0 // pred_fallthru
    _
  // Predicated region
  $region10: #{qnet_forward.1} parent=0 // pred_check
    _
  $region11: #{qnet_forward.1} parent=0 // pred_check_branch
    %15 = sbr.rel (0) target = $region13
  $region12: #{qnet_forward.1} parent=0 // pred_region
    _
  $region13: #{qnet_forward.1} parent=0 // pred_fallthru
    _
  // Predicated region
  $region14: #{qnet_forward.1} parent=0 // pred_check
    _
  $region15: #{qnet_forward.1} parent=0 // pred_check_branch
    %17 = sbr.rel (0) target = $region17
  $region16: #{qnet_forward.1} parent=0 // pred_region
    _
  $region17: #{qnet_forward.1} parent=0 // pred_fallthru
    _
  // Predicated region
  $region18: #{qnet_forward.1} parent=0 // pred_check
    _
  $region19: #{qnet_forward.1} parent=0 // pred_check_branch
    %19 = sbr.rel (0) target = $region21
  $region20: #{qnet_forward.1} parent=0 // pred_region
    _
  $region21: #{qnet_forward.1} parent=0 // pred_fallthru
    _
  %v21 = vld [vmem:[%s0] sm:$0xff]
  %v22 = vpack.c.bf16 %v21, %v21
  %v23 = vld [vmem:[%s1] sm:$0xff]
  %v24 = vld [vmem:[%s1 + $0x8] sm:$0xff]
  %v25 = vpack.c.bf16 %v23, %v23
  %v26 = vpack.c.bf16 %v24, %v24
  %v27 = vld [vmem:[%s2] sm:$0x3]
  %v29 = vlaneseq
  %v30 = vshrl.u32 %v29, 7
  %v31 = vsub.s32 0, %v30
  %v32 = vrot.slane %v27, %v31
  %v33 = vlaneseq
  %v34 = vshrl.u32 %v33, 7
  %v35 = vsub.s32 1, %v34
  %v36 = vrot.slane %v27, %v35
  %vm39 = vcmask 64512
  %v41 = vsel %vm39, %v22, 0
  %vm43 = vcmask 1043456
  %v45 = vsel %vm43, %v25, 0
  %v48 = vsel %vm43, %v26, 0
  %50 = vmatprep.subr.bf16.mxu0 %v48
  %51 = vmatpush1.bf16.msra.mxu0 %v45
  %52 = vmatprep.subr.bf16.mxu0 0
  %53 = vmatpush1.bf16.msra.mxu0 0
  %54 = vmatprep.subr.bf16.mxu0 0
  %55 = vmatpush1.bf16.msra.mxu0 0
  %56 = vmatprep.subr.bf16.mxu0 0
  %57 = vmatpush1.bf16.msra.mxu0 0
  %58 = vmatprep.subr.bf16.mxu0 0
  %59 = vmatpush1.bf16.msra.mxu0 0
  %60 = vmatprep.subr.bf16.mxu0 0
  %61 = vmatpush1.bf16.msra.mxu0 0
  %62 = vmatprep.subr.bf16.mxu0 0
  %63 = vmatpush1.bf16.msra.mxu0 0
  %64 = vmatprep.subr.bf16.mxu0 0
  %65 = vmatpush1.bf16.msra.mxu0 0
  %66 = vmatprep.subr.bf16.mxu0 0
  %67 = vmatpush1.bf16.msra.mxu0 0
  %68 = vmatprep.subr.bf16.mxu0 0
  %69 = vmatpush1.bf16.msra.mxu0 0
  %70 = vmatprep.subr.bf16.mxu0 0
  %71 = vmatpush1.bf16.msra.mxu0 0
  %72 = vmatprep.subr.bf16.mxu0 0
  %73 = vmatpush1.bf16.msra.mxu0 0
  %74 = vmatprep.subr.bf16.mxu0 0
  %75 = vmatpush1.bf16.msra.mxu0 0
  %76 = vmatprep.subr.bf16.mxu0 0
  %77 = vmatpush1.bf16.msra.mxu0 0
  %78 = vmatprep.subr.bf16.mxu0 0
  %79 = vmatpush1.bf16.msra.mxu0 0
  %80 = vmatprep.subr.bf16.mxu0 0
  %81 = vmatpush1.bf16.msra.mxu0 0
  %82 = vmatprep.mubr.bf16.mxu0 0
  %83 = vmatmul.mubr.bf16.gmra.mrb[0].mxu0 %v41
  %v84 = vpop.f32.mrb[0].mxu0
  %v85 = vadd.f32 %v32, %v84
  %v86 = vpop.f32.mrb[0].mxu0
  %v87 = vadd.f32 %v36, %v86
  %v88 = vpop.f32.mrb[0].mxu0
  %v89 = vpop.f32.mrb[0].mxu0
  %90 = vdwg.mxu0
  %v91 = vmax.f32 %v85, 0.0
  %v92 = vmax.f32 %v87, 0.0
  %v93 = vpack.c.bf16 %v91, %v91
  %v94 = vpack.c.bf16 %v92, %v92
  %v95 = vld [vmem:[%s3] sm:$0xff]
  %v96 = vld [vmem:[%s3 + $0x8] sm:$0xff]
  %v97 = vld [vmem:[%s3 + $0x10] sm:$0xff]
  %v98 = vld [vmem:[%s3 + $0x18] sm:$0xff]
  %v99 = vld [vmem:[%s3 + $0x20] sm:$0xff]
  %v100 = vld [vmem:[%s3 + $0x28] sm:$0xff]
  %v101 = vld [vmem:[%s3 + $0x30] sm:$0xff]
  %v102 = vld [vmem:[%s3 + $0x38] sm:$0xff]
  %v103 = vld [vmem:[%s3 + $0x40] sm:$0xff]
  %v104 = vld [vmem:[%s3 + $0x48] sm:$0xff]
  %v105 = vld [vmem:[%s3 + $0x50] sm:$0xff]
  %v106 = vld [vmem:[%s3 + $0x58] sm:$0xff]
  %v107 = vld [vmem:[%s3 + $0x60] sm:$0xff]
  %v108 = vld [vmem:[%s3 + $0x68] sm:$0xff]
  %v109 = vld [vmem:[%s3 + $0x70] sm:$0xff]
  %v110 = vld [vmem:[%s3 + $0x78] sm:$0xff]
  %v111 = vld [vmem:[%s3 + $0x80] sm:$0xff]
  %v112 = vld [vmem:[%s3 + $0x88] sm:$0xff]
  %v113 = vld [vmem:[%s3 + $0x90] sm:$0xff]
  %v114 = vld [vmem:[%s3 + $0x98] sm:$0xff]
  %v115 = vld [vmem:[%s3 + $0xa0] sm:$0xff]
  %v116 = vld [vmem:[%s3 + $0xa8] sm:$0xff]
  %v117 = vld [vmem:[%s3 + $0xb0] sm:$0xff]
  %v118 = vld [vmem:[%s3 + $0xb8] sm:$0xff]
  %v119 = vld [vmem:[%s3 + $0xc0] sm:$0xff]
  %v120 = vld [vmem:[%s3 + $0xc8] sm:$0xff]
  %v121 = vld [vmem:[%s3 + $0xd0] sm:$0xff]
  %v122 = vld [vmem:[%s3 + $0xd8] sm:$0xff]
  %v123 = vld [vmem:[%s3 + $0xe0] sm:$0xff]
  %v124 = vld [vmem:[%s3 + $0xe8] sm:$0xff]
  %v125 = vld [vmem:[%s3 + $0xf0] sm:$0xff]
  %v126 = vld [vmem:[%s3 + $0xf8] sm:$0xff]
  %v127 = vpack.c.bf16 %v96, %v95
  %v128 = vpack.c.bf16 %v98, %v97
  %v129 = vpack.c.bf16 %v100, %v99
  %v130 = vpack.c.bf16 %v102, %v101
  %v131 = vpack.c.bf16 %v104, %v103
  %v132 = vpack.c.bf16 %v106, %v105
  %v133 = vpack.c.bf16 %v108, %v107
  %v134 = vpack.c.bf16 %v110, %v109
  %v135 = vpack.c.bf16 %v112, %v111
  %v136 = vpack.c.bf16 %v114, %v113
  %v137 = vpack.c.bf16 %v116, %v115
  %v138 = vpack.c.bf16 %v118, %v117
  %v139 = vpack.c.bf16 %v120, %v119
  %v140 = vpack.c.bf16 %v122, %v121
  %v141 = vpack.c.bf16 %v124, %v123
  %v142 = vpack.c.bf16 %v126, %v125
  %v143 = vld [vmem:[%s4] sm:$0x1]
  %v145 = vlaneseq
  %v146 = vshrl.u32 %v145, 7
  %v147 = vsub.s32 0, %v146
  %v148 = vrot.slane %v143, %v147
  %150 = vmatprep.subr.bf16.mxu0 0
  %151 = vmatpush1.bf16.msra.mxu0 %v127
  %152 = vmatprep.subr.bf16.mxu0 0
  %153 = vmatpush1.bf16.msra.mxu0 %v128
  %154 = vmatprep.subr.bf16.mxu0 0
  %155 = vmatpush1.bf16.msra.mxu0 %v129
  %156 = vmatprep.subr.bf16.mxu0 0
  %157 = vmatpush1.bf16.msra.mxu0 %v130
  %158 = vmatprep.subr.bf16.mxu0 0
  %159 = vmatpush1.bf16.msra.mxu0 %v131
  %160 = vmatprep.subr.bf16.mxu0 0
  %161 = vmatpush1.bf16.msra.mxu0 %v132
  %162 = vmatprep.subr.bf16.mxu0 0
  %163 = vmatpush1.bf16.msra.mxu0 %v133
  %164 = vmatprep.subr.bf16.mxu0 0
  %165 = vmatpush1.bf16.msra.mxu0 %v134
  %166 = vmatprep.subr.bf16.mxu0 0
  %167 = vmatpush1.bf16.msra.mxu0 %v135
  %168 = vmatprep.subr.bf16.mxu0 0
  %169 = vmatpush1.bf16.msra.mxu0 %v136
  %170 = vmatprep.subr.bf16.mxu0 0
  %171 = vmatpush1.bf16.msra.mxu0 %v137
  %172 = vmatprep.subr.bf16.mxu0 0
  %173 = vmatpush1.bf16.msra.mxu0 %v138
  %174 = vmatprep.subr.bf16.mxu0 0
  %175 = vmatpush1.bf16.msra.mxu0 %v139
  %176 = vmatprep.subr.bf16.mxu0 0
  %177 = vmatpush1.bf16.msra.mxu0 %v140
  %178 = vmatprep.subr.bf16.mxu0 0
  %179 = vmatpush1.bf16.msra.mxu0 %v141
  %180 = vmatprep.subr.bf16.mxu0 0
  %181 = vmatpush1.bf16.msra.mxu0 %v142
  %182 = vmatprep.mubr.bf16.mxu0 %v94
  %183 = vmatmul.mubr.bf16.gmra.mrb[0].mxu0 %v93
  %v184 = vpop.f32.mrb[0].mxu0
  %v185 = vadd.f32 %v148, %v184
  %v186 = vpop.f32.mrb[0].mxu0
  %v187 = vpop.f32.mrb[0].mxu0
  %v188 = vpop.f32.mrb[0].mxu0
  %189 = vdwg.mxu0
  %190 = vst [vmem:[%s5] sm:$0xff] %v185
  // Predicated region
  $region22: #{qnet_forward.1} parent=0 // pred_check
    _
  $region23: #{qnet_forward.1} parent=0 // pred_check_branch
    %192 = sbr.rel (0) target = $region25
  $region24: #{qnet_forward.1} parent=0 // pred_region
    _
  $region25: #{qnet_forward.1} parent=0 // pred_fallthru
    _
  // Predicated region
  $region26: #{qnet_forward.1} parent=0 // pred_check
    _
  $region27: #{qnet_forward.1} parent=0 // pred_check_branch
    %194 = sbr.rel (0) target = $region29
  $region28: #{qnet_forward.1} parent=0 // pred_region
    _
  $region29: #{qnet_forward.1} parent=0 // pred_fallthru
    _

</llo_original>
